<compile_context>
chip_gen: v7x
topology: tpu7x:2x2x1
jax: 0.10.0
libtpu: 0.0.40
codegen_flags: <defaults>
</compile_context>

<pallas_src>
import functools
from typing import NamedTuple

import jax
import jax.numpy as jnp
from jax.experimental import pallas as pl
from jax.experimental.pallas import tpu as pltpu

LN_EPS = 1e-5   # nn.LayerNorm default
LANE = 128
SUBLANE = 8


def _round_up(n: int, m: int) -> int:
    return ((n + m - 1) // m) * m


def _pad_dim(n: int) -> int:
    # 256-wide N/K tiles fill the 2x256x256 MXU on v6e/v7x once dims scale up;
    # 128 is kept for small dims (and is already optimal on v5e's 4x128x128).
    return _round_up(n, 256 if n > 128 else LANE)


class ToyModelParams(NamedTuple):
    w1: jax.Array   # (in_p, hid_p)  bf16, zero-padded fc1 weight (in, out layout)
    gb: jax.Array   # (2,  hid_p)    f32,  row0 = gamma, row1 = beta, zero-padded
    w2: jax.Array   # (hid_p, out_p) bf16, zero-padded fc2 weight (in, out layout)
    in_features: int
    hidden: int
    out_features: int


def prepare_params(w1_t, gamma, beta, w2_t) -> ToyModelParams:
    """Pad + cast the parameters ONCE (cache the result; reuse every forward)."""
    in_f, hidden = w1_t.shape
    hid2, out_f = w2_t.shape
    assert hid2 == hidden, "fc2 input width must equal fc1 output width"
    assert gamma.size == hidden and beta.size == hidden

    in_p, hid_p, out_p = _pad_dim(in_f), _pad_dim(hidden), _pad_dim(out_f)

    bf16 = jnp.bfloat16
    w1_p = jnp.pad(w1_t.astype(bf16), ((0, in_p - in_f), (0, hid_p - hidden)))
    w2_p = jnp.pad(w2_t.astype(bf16), ((0, hid_p - hidden), (0, out_p - out_f)))
    gb = jnp.stack([jnp.reshape(gamma, (hidden,)),
                    jnp.reshape(beta, (hidden,))]).astype(jnp.float32)
    gb_p = jnp.pad(gb, ((0, 0), (0, hid_p - hidden)))   # pad lanes exactly 0

    return ToyModelParams(w1=w1_p, gb=gb_p, w2=w2_p,
                          in_features=in_f, hidden=hidden, out_features=out_f)


def toy_model_kernel(x_ref, w1_ref, gb_ref, w2_ref, o_ref, *, hidden: int):
    # Hoist all loads once per tile.
    x = x_ref[...]            # (tb, in_p)    bf16
    w1 = w1_ref[...]          # (in_p, hid_p) bf16 (VMEM-resident)
    w2 = w2_ref[...]          # (hid_p, out_p) bf16 (VMEM-resident)
    gamma = gb_ref[0:1, :]    # (1, hid_p) f32, zero in padded lanes
    beta = gb_ref[1:2, :]     # (1, hid_p) f32, zero in padded lanes

    # fc1 (bias=False) + ReLU: bf16 operands, f32 accumulation on the MXU.
    # Padded input lanes / weight rows are zero, so the product is exact and
    # the padded hidden lanes come out exactly 0 after ReLU.
    h = jnp.maximum(jnp.dot(x, w1, preferred_element_type=jnp.float32), 0.0)

    # LayerNorm over the TRUE hidden width, two-pass (mean, then masked
    # centered sum of squares) to avoid E[x^2]-E[x]^2 cancellation.  All f32.
    inv_h = 1.0 / float(hidden)
    mean = jnp.sum(h, axis=-1, keepdims=True) * inv_h        # pad lanes add 0
    lane = jax.lax.broadcasted_iota(jnp.int32, h.shape, 1)
    centered = jnp.where(lane < hidden, h - mean, 0.0)       # keep pad lanes 0
    var = jnp.sum(centered * centered, axis=-1, keepdims=True) * inv_h
    inv_std = jax.lax.rsqrt(var + LN_EPS)                     # EUP
    hn = centered * inv_std * gamma + beta                    # pad lanes stay 0

    # fc2 (bias=False): bf16 operands (LN math itself stayed f32), f32 accum,
    # lane-dense (padded) output -> unmasked vst.
    o_ref[...] = jnp.dot(hn.astype(jnp.bfloat16), w2,
                         preferred_element_type=jnp.float32).astype(o_ref.dtype)


def _build_call(tb, b_p, in_p, hid_p, out_p, hidden, vmem_limit_bytes,
                cost_estimate, single_buffer_resident):
    def resident_spec(shape):
        if single_buffer_resident:
            # Revisited every step with a constant index -> one buffer suffices.
            return pl.BlockSpec(shape, lambda i: (0, 0),
                                pipeline_mode=pl.Buffered(1))
        return pl.BlockSpec(shape, lambda i: (0, 0))

    kernel = functools.partial(toy_model_kernel, hidden=hidden)
    return pl.pallas_call(
        kernel,
        out_shape=jax.ShapeDtypeStruct((b_p, out_p), jnp.float32),
        grid_spec=pltpu.PrefetchScalarGridSpec(
            num_scalar_prefetch=0,
            grid=(b_p // tb,),
            in_specs=[
                pl.BlockSpec((tb, in_p), lambda i: (i, 0)),   # x tile (pipelined)
                resident_spec((in_p, hid_p)),                 # fc1 weight (resident)
                resident_spec((2, hid_p)),                    # gamma+beta (resident)
                resident_spec((hid_p, out_p)),                # fc2 weight (resident)
            ],
            out_specs=pl.BlockSpec((tb, out_p), lambda i: (i, 0)),
        ),
        compiler_params=pltpu.CompilerParams(
            dimension_semantics=("parallel",),
            vmem_limit_bytes=vmem_limit_bytes,
        ),
        cost_estimate=cost_estimate,
    )


def toy_model_forward(x, params: ToyModelParams, *, max_block_batch: int = 256):
    """Fused ToyModel forward.  x: (B, in_features) -> (B, out_features) f32."""
    B, in_f = x.shape
    assert in_f == params.in_features
    in_p, hid_p = params.w1.shape
    out_p = params.w2.shape[1]

    # Batch tile: sublane-aligned; default 256 so large batches give >=2 grid
    # steps (lets the "parallel" axis shard across v7x's two TensorCores) while
    # keeping the LN intermediates (3 x tb x hid_p f32) comfortably in VMEM.
    tb = min(max_block_batch, _round_up(B, SUBLANE))
    b_p = _round_up(B, tb)

    # Single fused wrapper op on x: bf16 cast (needed for the MXU anyway) +
    # batch/lane zero-pad.  No separate activation pad pass.
    x_p = jnp.pad(x.astype(jnp.bfloat16), ((0, b_p - B), (0, in_p - in_f)))

    # Explicit VMEM budget (v7x: 64 MiB physical, 32 MiB default scoped limit).
    resident = 2 * (in_p * hid_p + hid_p * out_p) + 4 * 2 * hid_p
    streamed = 2 * (tb * in_p * 2) + 2 * (tb * out_p * 4)     # double-buffered x/out
    ln_scratch = 6 * tb * hid_p * 4                            # h / centered / hn etc.
    vmem_limit = min(64 * 1024 * 1024,
                     max(32 * 1024 * 1024,
                         int(1.5 * (resident + streamed + ln_scratch)) + (4 << 20)))

    flops = 2 * b_p * in_p * hid_p + 2 * b_p * hid_p * out_p + 10 * b_p * hid_p
    bytes_accessed = (2 * b_p * in_p + 2 * in_p * hid_p + 4 * 2 * hid_p
                      + 2 * hid_p * out_p + 4 * b_p * out_p)
    ce = pl.CostEstimate(flops=flops, transcendentals=b_p,
                         bytes_accessed=bytes_accessed)

    args = (x_p, params.w1, params.gb, params.w2)
    try:
        out_padded = _build_call(tb, b_p, in_p, hid_p, out_p, params.hidden,
                                 vmem_limit, ce, single_buffer_resident=True)(*args)
    except Exception:
        # Fallback for jax builds where pipeline_mode=pl.Buffered(1) is not
        # supported on pallas_call BlockSpecs.
        out_padded = _build_call(tb, b_p, in_p, hid_p, out_p, params.hidden,
                                 vmem_limit, ce, single_buffer_resident=False)(*args)

    # Strip batch / lane padding.
    return out_padded[:B, :params.out_features]


def reference_forward(x, w1_t, gamma, beta, w2_t):
    """Pure-JAX reference with the same numerics (bf16 matmul operands, f32 LN)."""
    xb = x.astype(jnp.bfloat16)
    w1b = w1_t.astype(jnp.bfloat16)
    w2b = w2_t.astype(jnp.bfloat16)
    h = jnp.maximum(jnp.dot(xb, w1b, preferred_element_type=jnp.float32), 0.0)
    mean = jnp.mean(h, axis=-1, keepdims=True)
    var = jnp.mean((h - mean) ** 2, axis=-1, keepdims=True)
    hn = (h - mean) * jax.lax.rsqrt(var + LN_EPS)
    hn = hn * jnp.reshape(gamma, (1, -1)) + jnp.reshape(beta, (1, -1))
    return jnp.dot(hn.astype(jnp.bfloat16), w2b, preferred_element_type=jnp.float32)


if __name__ == "__main__":
    # Shapes implied by the module's driver: x = randn(10, 5) -> batch=10,
    # in_features=5, hidden=10 (fixed by the module), out_features chosen = 5.
    # TODO(synk): the module's print(...) of intermediate dtypes is a debug
    # side effect with no kernel equivalent; omitted.
    batch, in_features, hidden, out_features = 10, 5, 10, 5

    key = jax.random.PRNGKey(0)
    kx, kw1, kw2 = jax.random.split(key, 3)

    x = jax.random.normal(kx, (batch, in_features), dtype=jnp.float32)
    # PyTorch Linear stores (out, in); we store the transposed (in, out) form.
    w1_t = jax.random.normal(kw1, (in_features, hidden), dtype=jnp.float32) * 0.1
    w2_t = jax.random.normal(kw2, (hidden, out_features), dtype=jnp.float32) * 0.1
    gamma = jnp.ones((hidden,), dtype=jnp.float32)   # LayerNorm weight init
    beta = jnp.zeros((hidden,), dtype=jnp.float32)   # LayerNorm bias init

    params = prepare_params(w1_t, gamma, beta, w2_t)   # pad/cast ONCE, reuse
    out = toy_model_forward(x, params)
    out = jax.block_until_ready(out)

    ref = reference_forward(x, w1_t, gamma, beta, w2_t)
    assert out.shape == (batch, out_features)
    assert out.dtype == jnp.float32
    assert jnp.allclose(out, ref, atol=2e-3, rtol=2e-3), (
        f"max abs err = {jnp.max(jnp.abs(out - ref))}")

    print("KERNEL_OK")
</pallas_src>

<mosaic_0001>
module attributes {stable_mosaic.version = 11 : i64} {
  func.func @toy_model_kernel(%arg0: i32, %arg1: memref<16x128xbf16, #tpu.memory_space<vmem>>, %arg2: memref<128x128xbf16, #tpu.memory_space<vmem>>, %arg3: memref<2x128xf32, #tpu.memory_space<vmem>>, %arg4: memref<128x128xbf16, #tpu.memory_space<vmem>>, %arg5: memref<16x128xf32, #tpu.memory_space<vmem>>) attributes {dimension_semantics = [#tpu.dimension_semantics<parallel>], iteration_bounds = array<i64: 1>, scalar_prefetch = 0 : i64, scratch_operands = 0 : i64, tpu.core_type = #tpu.core_type<tc>, window_params = [{transform_indices = @transform_0, window_bounds = array<i64: 16, 128>}, {pipeline_mode = #tpu.pipeline_mode<synchronous>, transform_indices = @transform_1, window_bounds = array<i64: 128, 128>}, {pipeline_mode = #tpu.pipeline_mode<synchronous>, transform_indices = @transform_2, window_bounds = array<i64: 2, 128>}, {pipeline_mode = #tpu.pipeline_mode<synchronous>, transform_indices = @transform_3, window_bounds = array<i64: 128, 128>}, {transform_indices = @transform_4, window_bounds = array<i64: 16, 128>}]} {
    %c0 = arith.constant 0 : index
    %c0_0 = arith.constant 0 : index
    %0 = vector.load %arg1[%c0, %c0_0] : memref<16x128xbf16, #tpu.memory_space<vmem>>, vector<16x128xbf16>
    %c0_1 = arith.constant 0 : index
    %c0_2 = arith.constant 0 : index
    %1 = vector.load %arg2[%c0_1, %c0_2] : memref<128x128xbf16, #tpu.memory_space<vmem>>, vector<128x128xbf16>
    %c0_3 = arith.constant 0 : index
    %c0_4 = arith.constant 0 : index
    %2 = vector.load %arg4[%c0_3, %c0_4] : memref<128x128xbf16, #tpu.memory_space<vmem>>, vector<128x128xbf16>
    %c0_5 = arith.constant 0 : index
    %c0_6 = arith.constant 0 : index
    %3 = vector.load %arg3[%c0_5, %c0_6] : memref<2x128xf32, #tpu.memory_space<vmem>>, vector<1x128xf32>
    %c1 = arith.constant 1 : index
    %c0_7 = arith.constant 0 : index
    %4 = vector.load %arg3[%c1, %c0_7] : memref<2x128xf32, #tpu.memory_space<vmem>>, vector<1x128xf32>
    %cst = arith.constant dense<0.000000e+00> : vector<16x128xf32>
    %5 = tpu.matmul %0, %1, %cst {dimension_numbers = #tpu.dot_dimension_numbers<[1], [0], [0], [1], [0, 0, 1, 1], [], []>} : vector<16x128xbf16>, vector<128x128xbf16>, vector<16x128xf32> -> vector<16x128xf32>
    %cst_8 = arith.constant 0.000000e+00 : f32
    %6 = vector.broadcast %cst_8 : f32 to vector<16x128xf32>
    %7 = arith.maximumf %5, %6 : vector<16x128xf32>
    %cst_9 = arith.constant dense<0.000000e+00> : vector<16xf32>
    %8 = vector.multi_reduction <add>, %7, %cst_9 [1] : vector<16x128xf32> to vector<16xf32>
    %9 = vector.shape_cast %8 : vector<16xf32> to vector<16x1xf32>
    %cst_10 = arith.constant 1.000000e-01 : f32
    %10 = vector.broadcast %cst_10 : f32 to vector<16x1xf32>
    %11 = arith.mulf %9, %10 : vector<16x1xf32>
    %12 = tpu.iota {dimensions = array<i32: 1>} : vector<16x128xi32>
    %c10_i32 = arith.constant 10 : i32
    %13 = vector.broadcast %c10_i32 : i32 to vector<16x128xi32>
    %14 = arith.cmpi slt, %12, %13 : vector<16x128xi32>
    %15 = vector.broadcast %11 : vector<16x1xf32> to vector<16x128xf32>
    %16 = arith.subf %7, %15 : vector<16x128xf32>
    %cst_11 = arith.constant 0.000000e+00 : f32
    %17 = vector.broadcast %cst_11 : f32 to vector<16x128xf32>
    %18 = arith.select %14, %16, %17 : vector<16x128xi1>, vector<16x128xf32>
    %19 = arith.mulf %18, %18 : vector<16x128xf32>
    %cst_12 = arith.constant dense<0.000000e+00> : vector<16xf32>
    %20 = vector.multi_reduction <add>, %19, %cst_12 [1] : vector<16x128xf32> to vector<16xf32>
    %21 = vector.shape_cast %20 : vector<16xf32> to vector<16x1xf32>
    %cst_13 = arith.constant 1.000000e-01 : f32
    %22 = vector.broadcast %cst_13 : f32 to vector<16x1xf32>
    %23 = arith.mulf %21, %22 : vector<16x1xf32>
    %cst_14 = arith.constant 9.99999974E-6 : f32
    %24 = vector.broadcast %cst_14 : f32 to vector<16x1xf32>
    %25 = arith.addf %23, %24 : vector<16x1xf32>
    %26 = math.rsqrt %25 : vector<16x1xf32>
    %27 = vector.broadcast %26 : vector<16x1xf32> to vector<16x128xf32>
    %28 = arith.mulf %18, %27 : vector<16x128xf32>
    %29 = vector.broadcast %3 : vector<1x128xf32> to vector<16x128xf32>
    %30 = arith.mulf %28, %29 : vector<16x128xf32>
    %31 = vector.broadcast %4 : vector<1x128xf32> to vector<16x128xf32>
    %32 = arith.addf %30, %31 : vector<16x128xf32>
    %33 = arith.truncf %32 : vector<16x128xf32> to vector<16x128xbf16>
    %cst_15 = arith.constant dense<0.000000e+00> : vector<16x128xf32>
    %34 = tpu.matmul %33, %2, %cst_15 {dimension_numbers = #tpu.dot_dimension_numbers<[1], [0], [0], [1], [0, 0, 1, 1], [], []>} : vector<16x128xbf16>, vector<128x128xbf16>, vector<16x128xf32> -> vector<16x128xf32>
    %c0_16 = arith.constant 0 : index
    %c0_17 = arith.constant 0 : index
    %35 = vector.load %arg5[%c0_16, %c0_17] : memref<16x128xf32, #tpu.memory_space<vmem>>, vector<16x128xf32>
    tpu.vector_store %arg5[%c0_16, %c0_17], %34 {strides = array<i32>} : memref<16x128xf32, #tpu.memory_space<vmem>>, vector<16x128xf32>,
    return
  }
  func.func @transform_0(%arg0: i32) -> (i32, i32) {
    %c0_i32 = arith.constant 0 : i32
    %c0_i32_0 = arith.constant 0 : i32
    return %arg0, %c0_i32 : i32, i32
  }
  func.func @transform_1(%arg0: i32) -> (i32, i32) {
    %c0_i32 = arith.constant 0 : i32
    %c0_i32_0 = arith.constant 0 : i32
    %c0_i32_1 = arith.constant 0 : i32
    return %c0_i32, %c0_i32_0 : i32, i32
  }
  func.func @transform_2(%arg0: i32) -> (i32, i32) {
    %c0_i32 = arith.constant 0 : i32
    %c0_i32_0 = arith.constant 0 : i32
    %c0_i32_1 = arith.constant 0 : i32
    return %c0_i32, %c0_i32_0 : i32, i32
  }
  func.func @transform_3(%arg0: i32) -> (i32, i32) {
    %c0_i32 = arith.constant 0 : i32
    %c0_i32_0 = arith.constant 0 : i32
    %c0_i32_1 = arith.constant 0 : i32
    return %c0_i32, %c0_i32_0 : i32, i32
  }
  func.func @transform_4(%arg0: i32) -> (i32, i32) {
    %c0_i32 = arith.constant 0 : i32
    %c0_i32_0 = arith.constant 0 : i32
    return %arg0, %c0_i32 : i32, i32
  }
}

module attributes {stable_mosaic.version = 11 : i64} {
  func.func @toy_model_kernel(%arg0: i32, %arg1: memref<16x128xbf16, #tpu.memory_space<vmem>>, %arg2: memref<128x128xbf16, #tpu.memory_space<vmem>>, %arg3: memref<2x128xf32, #tpu.memory_space<vmem>>, %arg4: memref<128x128xbf16, #tpu.memory_space<vmem>>, %arg5: memref<16x128xf32, #tpu.memory_space<vmem>>) attributes {dimension_semantics = [#tpu.dimension_semantics<parallel>], iteration_bounds = array<i64: 1>, scalar_prefetch = 0 : i64, scratch_operands = 0 : i64, tpu.core_type = #tpu.core_type<tc>, window_params = [{transform_indices = @transform_0, window_bounds = array<i64: 16, 128>}, {pipeline_mode = #tpu.pipeline_mode<synchronous>, transform_indices = @transform_1, window_bounds = array<i64: 128, 128>}, {pipeline_mode = #tpu.pipeline_mode<synchronous>, transform_indices = @transform_2, window_bounds = array<i64: 2, 128>}, {pipeline_mode = #tpu.pipeline_mode<synchronous>, transform_indices = @transform_3, window_bounds = array<i64: 128, 128>}, {transform_indices = @transform_4, window_bounds = array<i64: 16, 128>}]} {
    %c0 = arith.constant 0 : index
    %c0_0 = arith.constant 0 : index
    %0 = vector.load %arg1[%c0, %c0_0] : memref<16x128xbf16, #tpu.memory_space<vmem>>, vector<16x128xbf16>
    %c0_1 = arith.constant 0 : index
    %c0_2 = arith.constant 0 : index
    %1 = vector.load %arg2[%c0_1, %c0_2] : memref<128x128xbf16, #tpu.memory_space<vmem>>, vector<128x128xbf16>
    %c0_3 = arith.constant 0 : index
    %c0_4 = arith.constant 0 : index
    %2 = vector.load %arg4[%c0_3, %c0_4] : memref<128x128xbf16, #tpu.memory_space<vmem>>, vector<128x128xbf16>
    %c0_5 = arith.constant 0 : index
    %c0_6 = arith.constant 0 : index
    %3 = vector.load %arg3[%c0_5, %c0_6] : memref<2x128xf32, #tpu.memory_space<vmem>>, vector<1x128xf32>
    %c1 = arith.constant 1 : index
    %c0_7 = arith.constant 0 : index
    %4 = vector.load %arg3[%c1, %c0_7] : memref<2x128xf32, #tpu.memory_space<vmem>>, vector<1x128xf32>
    %cst = arith.constant dense<0.000000e+00> : vector<16x128xf32>
    %5 = tpu.matmul %0, %1, %cst {dimension_numbers = #tpu.dot_dimension_numbers<[1], [0], [0], [1], [0, 0, 1, 1], [], []>} : vector<16x128xbf16>, vector<128x128xbf16>, vector<16x128xf32> -> vector<16x128xf32>
    %cst_8 = arith.constant 0.000000e+00 : f32
    %6 = vector.broadcast %cst_8 : f32 to vector<16x128xf32>
    %7 = arith.maximumf %5, %6 : vector<16x128xf32>
    %cst_9 = arith.constant dense<0.000000e+00> : vector<16xf32>
    %8 = vector.multi_reduction <add>, %7, %cst_9 [1] : vector<16x128xf32> to vector<16xf32>
    %9 = vector.shape_cast %8 : vector<16xf32> to vector<16x1xf32>
    %cst_10 = arith.constant 1.000000e-01 : f32
    %10 = vector.broadcast %cst_10 : f32 to vector<16x1xf32>
    %11 = arith.mulf %9, %10 : vector<16x1xf32>
    %12 = tpu.iota {dimensions = array<i32: 1>} : vector<16x128xi32>
    %c10_i32 = arith.constant 10 : i32
    %13 = vector.broadcast %c10_i32 : i32 to vector<16x128xi32>
    %14 = arith.cmpi slt, %12, %13 : vector<16x128xi32>
    %15 = vector.broadcast %11 : vector<16x1xf32> to vector<16x128xf32>
    %16 = arith.subf %7, %15 : vector<16x128xf32>
    %cst_11 = arith.constant 0.000000e+00 : f32
    %17 = vector.broadcast %cst_11 : f32 to vector<16x128xf32>
    %18 = arith.select %14, %16, %17 : vector<16x128xi1>, vector<16x128xf32>
    %19 = arith.mulf %18, %18 : vector<16x128xf32>
    %cst_12 = arith.constant dense<0.000000e+00> : vector<16xf32>
    %20 = vector.multi_reduction <add>, %19, %cst_12 [1] : vector<16x128xf32> to vector<16xf32>
    %21 = vector.shape_cast %20 : vector<16xf32> to vector<16x1xf32>
    %cst_13 = arith.constant 1.000000e-01 : f32
    %22 = vector.broadcast %cst_13 : f32 to vector<16x1xf32>
    %23 = arith.mulf %21, %22 : vector<16x1xf32>
    %cst_14 = arith.constant 9.99999974E-6 : f32
    %24 = vector.broadcast %cst_14 : f32 to vector<16x1xf32>
    %25 = arith.addf %23, %24 : vector<16x1xf32>
    %26 = math.rsqrt %25 : vector<16x1xf32>
    %27 = vector.broadcast %26 : vector<16x1xf32> to vector<16x128xf32>
    %28 = arith.mulf %18, %27 : vector<16x128xf32>
    %29 = vector.broadcast %3 : vector<1x128xf32> to vector<16x128xf32>
    %30 = arith.mulf %28, %29 : vector<16x128xf32>
    %31 = vector.broadcast %4 : vector<1x128xf32> to vector<16x128xf32>
    %32 = arith.addf %30, %31 : vector<16x128xf32>
    %33 = arith.truncf %32 : vector<16x128xf32> to vector<16x128xbf16>
    %cst_15 = arith.constant dense<0.000000e+00> : vector<16x128xf32>
    %34 = tpu.matmul %33, %2, %cst_15 {dimension_numbers = #tpu.dot_dimension_numbers<[1], [0], [0], [1], [0, 0, 1, 1], [], []>} : vector<16x128xbf16>, vector<128x128xbf16>, vector<16x128xf32> -> vector<16x128xf32>
    %c0_16 = arith.constant 0 : index
    %c0_17 = arith.constant 0 : index
    %35 = vector.load %arg5[%c0_16, %c0_17] : memref<16x128xf32, #tpu.memory_space<vmem>>, vector<16x128xf32>
    tpu.vector_store %arg5[%c0_16, %c0_17], %34 {strides = array<i32>} : memref<16x128xf32, #tpu.memory_space<vmem>>, vector<16x128xf32>,
    return
  }
  func.func @transform_0(%arg0: i32) -> (i32, i32) {
    %c0_i32 = arith.constant 0 : i32
    %c0_i32_0 = arith.constant 0 : i32
    return %arg0, %c0_i32 : i32, i32
  }
  func.func @transform_1(%arg0: i32) -> (i32, i32) {
    %c0_i32 = arith.constant 0 : i32
    %c0_i32_0 = arith.constant 0 : i32
    %c0_i32_1 = arith.constant 0 : i32
    return %c0_i32, %c0_i32_0 : i32, i32
  }
  func.func @transform_2(%arg0: i32) -> (i32, i32) {
    %c0_i32 = arith.constant 0 : i32
    %c0_i32_0 = arith.constant 0 : i32
    %c0_i32_1 = arith.constant 0 : i32
    return %c0_i32, %c0_i32_0 : i32, i32
  }
  func.func @transform_3(%arg0: i32) -> (i32, i32) {
    %c0_i32 = arith.constant 0 : i32
    %c0_i32_0 = arith.constant 0 : i32
    %c0_i32_1 = arith.constant 0 : i32
    return %c0_i32, %c0_i32_0 : i32, i32
  }
  func.func @transform_4(%arg0: i32) -> (i32, i32) {
    %c0_i32 = arith.constant 0 : i32
    %c0_i32_0 = arith.constant 0 : i32
    return %arg0, %c0_i32 : i32, i32
  }
}

</mosaic_0001>

<llo_original>
// kernel: tpu_custom_call.1
$region0: #{tpu_custom_call.1}
  #allocation0 [shape = 'u32[]', space=smem, size = 0x4, offset = 0x4, fixed_abs, tag = 'smem constant byte address 0x4 - core index']
  #allocation1 [shape = 'u32[144,128]{1,0:T(1,128)}', space=vmem, size = 0x12000, scoped, tag = 'internal scratch']
  %s0 = inlined_call_operand.hbm [shape: bf16[16,128], index: 0, kind: input, shape index: {}]
  %s1 = inlined_call_operand.hbm [shape: bf16[128,128], index: 1, kind: input, shape index: {}]
  %s2 = inlined_call_operand.vmem [shape: f32[2,128], index: 2, kind: input, shape index: {}]
  %s3 = inlined_call_operand.hbm [shape: bf16[128,128], index: 3, kind: input, shape index: {}]
  %s4 = inlined_call_operand.hbm [shape: f32[16,128], index: 4, kind: output, shape index: {}]
  %s5 = sld [smem:[#allocation0]]
  $region38: #{tpu_custom_call.1} parent=0
    _
  %s7 = ssub.s32 1, %s5
  %s8 = scalar_select 0, %s7, %s5
  $region1: #{tpu_custom_call.1} parent=0
    #allocation2 [shape = 'u8[4096]{0}', space=vmem, size = 0x1000, scoped, tag = 'input window, operand 0, single buffered']
    #allocation3 [shape = 's32[1]{0}', space=sflag, size = 0x4, scoped, tag = 'scoped memory for tpu_custom_call.1']
    #allocation4 [shape = 's32[1]{0}', space=sflag, size = 0x4, scoped, tag = 'scoped memory for tpu_custom_call.1']
    #allocation5 [shape = 'u8[32768]{0}', space=vmem, size = 0x8000, scoped, tag = 'input window, operand 1, single buffered']
    #allocation6 [shape = 's32[1]{0}', space=sflag, size = 0x4, scoped, tag = 'scoped memory for tpu_custom_call.1']
    #allocation7 [shape = 'u8[32768]{0}', space=vmem, size = 0x8000, scoped, tag = 'input window, operand 3, single buffered']
    #allocation8 [shape = 'u8[8192]{0}', space=vmem, size = 0x2000, scoped, tag = 'output window, operand 0, single buffered']
    %9 = vsyncpa [#allocation3], 0
    %10 = vsyncpa [#allocation6], 0
    %11 = vsyncpa [#allocation4], 0
    // Predicated region
    $region2: #{tpu_custom_call.1} parent=1 // pred_check
      _
    $region3: #{tpu_custom_call.1} parent=1 // pred_check_branch
      %13 = sbr.rel (0) target = $region5
    $region4: #{tpu_custom_call.1} parent=1 // pred_region
      %s15 = ssub.s32 128, 128
      %16 = vsyncadd [#allocation3], %s15
      %s17 = sshll.u32 [#allocation2], 4
      %s18 = int_to_ptr.vmem [resolvable:$true] %s17
      %23 = dma.hbm_to_vmem [thread:$0]  %s0, 128, %s18, [#allocation3], 64, 64, 4
    $region5: #{tpu_custom_call.1} parent=1 // pred_fallthru
      _
    // Predicated region
    $region6: #{tpu_custom_call.1} parent=1 // pred_check
      _
    $region7: #{tpu_custom_call.1} parent=1 // pred_check_branch
      %25 = sbr.rel (0) target = $region9
    $region8: #{tpu_custom_call.1} parent=1 // pred_region
      %s27 = ssub.s32 1024, 1024
      %28 = vsyncadd [#allocation6], %s27
      %s29 = sshll.u32 [#allocation5], 4
      %s30 = int_to_ptr.vmem [resolvable:$true] %s29
      %35 = dma.hbm_to_vmem [thread:$0]  %s1, 1024, %s30, [#allocation6], 64, 64, 4
    $region9: #{tpu_custom_call.1} parent=1 // pred_fallthru
      _
    // Predicated region
    $region10: #{tpu_custom_call.1} parent=1 // pred_check
      _
    $region11: #{tpu_custom_call.1} parent=1 // pred_check_branch
      %37 = sbr.rel (0) target = $region13
    $region12: #{tpu_custom_call.1} parent=1 // pred_region
      _
    $region13: #{tpu_custom_call.1} parent=1 // pred_fallthru
      _
    // Predicated region
    $region14: #{tpu_custom_call.1} parent=1 // pred_check
      _
    $region15: #{tpu_custom_call.1} parent=1 // pred_check_branch
      %39 = sbr.rel (0) target = $region17
    $region16: #{tpu_custom_call.1} parent=1 // pred_region
      %s41 = ssub.s32 1024, 1024
      %42 = vsyncadd [#allocation6], %s41
      %s43 = sshll.u32 [#allocation7], 4
      %s44 = int_to_ptr.vmem [resolvable:$true] %s43
      %49 = dma.hbm_to_vmem [thread:$0]  %s3, 1024, %s44, [#allocation6], 64, 64, 4
    $region17: #{tpu_custom_call.1} parent=1 // pred_fallthru
      _
    // Predicated region
    $region18: #{tpu_custom_call.1} parent=1 // pred_check
      _
    $region19: #{tpu_custom_call.1} parent=1 // pred_check_branch
      %51 = sbr.rel (0) target = $region21
    $region20: #{tpu_custom_call.1} parent=1 // pred_region
      %52 = dma.done [#allocation3], 128
    $region21: #{tpu_custom_call.1} parent=1 // pred_fallthru
      _
    // Predicated region
    $region22: #{tpu_custom_call.1} parent=1 // pred_check
      _
    $region23: #{tpu_custom_call.1} parent=1 // pred_check_branch
      %54 = sbr.rel (0) target = $region25
    $region24: #{tpu_custom_call.1} parent=1 // pred_region
      %55 = dma.done [#allocation6], 1024
    $region25: #{tpu_custom_call.1} parent=1 // pred_fallthru
      _
    // Predicated region
    $region26: #{tpu_custom_call.1} parent=1 // pred_check
      _
    $region27: #{tpu_custom_call.1} parent=1 // pred_check_branch
      %57 = sbr.rel (0) target = $region29
    $region28: #{tpu_custom_call.1} parent=1 // pred_region
      %58 = dma.done [#allocation6], 1024
    $region29: #{tpu_custom_call.1} parent=1 // pred_fallthru
      _
    %v60 = vld [vmem:[#allocation2] sm:$0xf]
    %v61 = vld [vmem:[#allocation2 + $0x4] sm:$0xf]
    %v62 = vld [vmem:[#allocation5] sm:$0xf]
    %v63 = vld [vmem:[#allocation5 + $0x4] sm:$0xf]
    %v64 = vld [vmem:[#allocation5 + $0x8] sm:$0xf]
    %v65 = vld [vmem:[#allocation5 + $0xc] sm:$0xf]
    %v66 = vld [vmem:[#allocation5 + $0x10] sm:$0xf]
    %v67 = vld [vmem:[#allocation5 + $0x14] sm:$0xf]
    %v68 = vld [vmem:[#allocation5 + $0x18] sm:$0xf]
    %v69 = vld [vmem:[#allocation5 + $0x1c] sm:$0xf]
    %v70 = vld [vmem:[#allocation5 + $0x20] sm:$0xf]
    %v71 = vld [vmem:[#allocation5 + $0x24] sm:$0xf]
    %v72 = vld [vmem:[#allocation5 + $0x28] sm:$0xf]
    %v73 = vld [vmem:[#allocation5 + $0x2c] sm:$0xf]
    %v74 = vld [vmem:[#allocation5 + $0x30] sm:$0xf]
    %v75 = vld [vmem:[#allocation5 + $0x34] sm:$0xf]
    %v76 = vld [vmem:[#allocation5 + $0x38] sm:$0xf]
    %v77 = vld [vmem:[#allocation5 + $0x3c] sm:$0xf]
    %v78 = vld [vmem:[#allocation7] sm:$0xf]
    %v79 = vld [vmem:[#allocation7 + $0x4] sm:$0xf]
    %v80 = vld [vmem:[#allocation7 + $0x8] sm:$0xf]
    %v81 = vld [vmem:[#allocation7 + $0xc] sm:$0xf]
    %v82 = vld [vmem:[#allocation7 + $0x10] sm:$0xf]
    %v83 = vld [vmem:[#allocation7 + $0x14] sm:$0xf]
    %v84 = vld [vmem:[#allocation7 + $0x18] sm:$0xf]
    %v85 = vld [vmem:[#allocation7 + $0x1c] sm:$0xf]
    %v86 = vld [vmem:[#allocation7 + $0x20] sm:$0xf]
    %v87 = vld [vmem:[#allocation7 + $0x24] sm:$0xf]
    %v88 = vld [vmem:[#allocation7 + $0x28] sm:$0xf]
    %v89 = vld [vmem:[#allocation7 + $0x2c] sm:$0xf]
    %v90 = vld [vmem:[#allocation7 + $0x30] sm:$0xf]
    %v91 = vld [vmem:[#allocation7 + $0x34] sm:$0xf]
    %v92 = vld [vmem:[#allocation7 + $0x38] sm:$0xf]
    %v93 = vld [vmem:[#allocation7 + $0x3c] sm:$0xf]
    %v94 = vld [vmem:[%s2] sm:$0x1]
    %v95 = vld [vmem:[%s2 + $0x1] sm:$0x1]
    %v98 = vunpack.c.l.b16 %v60
    %v99 = vunpack.c.l.b16 %v61
    %v100 = vpack.c.b16 %v99, %v98
    %v118 = vunpack.c.l.b16 %v62
    %v119 = vunpack.c.l.b16 %v63
    %v120 = vunpack.c.l.b16 %v64
    %v121 = vunpack.c.l.b16 %v65
    %v122 = vunpack.c.l.b16 %v66
    %v123 = vunpack.c.l.b16 %v67
    %v124 = vunpack.c.l.b16 %v68
    %v125 = vunpack.c.l.b16 %v69
    %v126 = vunpack.c.l.b16 %v70
    %v127 = vunpack.c.l.b16 %v71
    %v128 = vunpack.c.l.b16 %v72
    %v129 = vunpack.c.l.b16 %v73
    %v130 = vunpack.c.l.b16 %v74
    %v131 = vunpack.c.l.b16 %v75
    %v132 = vunpack.c.l.b16 %v76
    %v133 = vunpack.c.l.b16 %v77
    %v134 = vpack.c.b16 %v119, %v118
    %v135 = vpack.c.b16 %v121, %v120
    %v136 = vpack.c.b16 %v123, %v122
    %v137 = vpack.c.b16 %v125, %v124
    %v138 = vpack.c.b16 %v127, %v126
    %v139 = vpack.c.b16 %v129, %v128
    %v140 = vpack.c.b16 %v131, %v130
    %v141 = vpack.c.b16 %v133, %v132
    %150 = vmatprep.subr.bf16.mxu0 0
    %151 = vmatpush1.bf16.msra.mxu0 %v134
    %152 = vmatprep.subr.bf16.mxu0 0
    %153 = vmatpush1.bf16.msra.mxu0 %v135
    %154 = vmatprep.subr.bf16.mxu0 0
    %155 = vmatpush1.bf16.msra.mxu0 %v136
    %156 = vmatprep.subr.bf16.mxu0 0
    %157 = vmatpush1.bf16.msra.mxu0 %v137
    %158 = vmatprep.subr.bf16.mxu0 0
    %159 = vmatpush1.bf16.msra.mxu0 %v138
    %160 = vmatprep.subr.bf16.mxu0 0
    %161 = vmatpush1.bf16.msra.mxu0 %v139
    %162 = vmatprep.subr.bf16.mxu0 0
    %163 = vmatpush1.bf16.msra.mxu0 %v140
    %164 = vmatprep.subr.bf16.mxu0 0
    %165 = vmatpush1.bf16.msra.mxu0 %v141
    %166 = vmatprep.subr.bf16.mxu0 0
    %167 = vmatpush1.bf16.msra.mxu0 0
    %168 = vmatprep.subr.bf16.mxu0 0
    %169 = vmatpush1.bf16.msra.mxu0 0
    %170 = vmatprep.subr.bf16.mxu0 0
    %171 = vmatpush1.bf16.msra.mxu0 0
    %172 = vmatprep.subr.bf16.mxu0 0
    %173 = vmatpush1.bf16.msra.mxu0 0
    %174 = vmatprep.subr.bf16.mxu0 0
    %175 = vmatpush1.bf16.msra.mxu0 0
    %176 = vmatprep.subr.bf16.mxu0 0
    %177 = vmatpush1.bf16.msra.mxu0 0
    %178 = vmatprep.subr.bf16.mxu0 0
    %179 = vmatpush1.bf16.msra.mxu0 0
    %180 = vmatprep.subr.bf16.mxu0 0
    %181 = vmatpush1.bf16.msra.mxu0 0
    %182 = vmatprep.mubr.bf16.mxu0 0
    %183 = vmatmul.mubr.bf16.gmra.mrb[0].mxu0 %v100
    %v184 = vpop.f32.mrb[0].mxu0
    %v185 = vadd.f32 0.0, %v184
    %v186 = vpop.f32.mrb[0].mxu0
    %v187 = vpop.f32.mrb[0].mxu0
    %v188 = vadd.f32 0.0, %v187
    %v189 = vpop.f32.mrb[0].mxu0
    %190 = vdwg.mxu0
    %v191 = vmax.f32 %v185, 0.0
    %v192 = vmax.f32 %v188, 0.0
    %193 = vadd.xlane.f32.xlu0 %v191
    %v194 = vpop.xlane.xlu0 %193
    %195 = vadd.xlane.f32.xlu0 %v192
    %v196 = vpop.xlane.xlu0 %195
    %v197 = vmul.f32 %v194, 0.1
    %v198 = vmul.f32 %v196, 0.1
    %v199 = vlaneseq
    %v200 = vand.u32 %v199, 127
    %vm201 = vcmp.lt.s32.totalorder %v200, 10
    %v202 = vsub.f32 %v191, %v197
    %v203 = vsub.f32 %v192, %v198
    %v204 = vsel %vm201, %v202, 0.0
    %v205 = vsel %vm201, %v203, 0.0
    %v206 = vmul.f32 %v204, %v204
    %v207 = vmul.f32 %v205, %v205
    %208 = vadd.xlane.f32.xlu0 %v206
    %v209 = vpop.xlane.xlu0 %208
    %210 = vadd.xlane.f32.xlu0 %v207
    %v211 = vpop.xlane.xlu0 %210
    %v212 = vmul.f32 %v209, 0.1
    %v213 = vmul.f32 %v211, 0.1
    %v214 = vadd.f32 %v212, 1e-05
    %v215 = vadd.f32 %v213, 1e-05
    %v216 = vrsqrt.pop %v214
    %v217 = vrsqrt.pop %v215
    %v218 = vmul.f32 %v204, %v216
    %v219 = vmul.f32 %v205, %v217
    %v220 = vlaneseq
    %v221 = vshrl.u32 %v220, 7
    %v222 = vsub.s32 0, %v221
    %v223 = vrot.slane %v94, %v222
    %v224 = vmul.f32 %v218, %v223
    %v225 = vmul.f32 %v219, %v223
    %v226 = vlaneseq
    %v227 = vshrl.u32 %v226, 7
    %v228 = vsub.s32 0, %v227
    %v229 = vrot.slane %v95, %v228
    %v230 = vadd.f32 %v224, %v229
    %v231 = vadd.f32 %v225, %v229
    %v232 = vpack.c.bf16 %v231, %v230
    %v249 = vunpack.c.l.b16 %v78
    %v250 = vunpack.c.l.b16 %v79
    %v251 = vunpack.c.l.b16 %v80
    %v252 = vunpack.c.l.b16 %v81
    %v253 = vunpack.c.l.b16 %v82
    %v254 = vunpack.c.l.b16 %v83
    %v255 = vunpack.c.l.b16 %v84
    %v256 = vunpack.c.l.b16 %v85
    %v257 = vunpack.c.l.b16 %v86
    %v258 = vunpack.c.l.b16 %v87
    %v259 = vunpack.c.l.b16 %v88
    %v260 = vunpack.c.l.b16 %v89
    %v261 = vunpack.c.l.b16 %v90
    %v262 = vunpack.c.l.b16 %v91
    %v263 = vunpack.c.l.b16 %v92
    %v264 = vunpack.c.l.b16 %v93
    %v265 = vpack.c.b16 %v250, %v249
    %v266 = vpack.c.b16 %v252, %v251
    %v267 = vpack.c.b16 %v254, %v253
    %v268 = vpack.c.b16 %v256, %v255
    %v269 = vpack.c.b16 %v258, %v257
    %v270 = vpack.c.b16 %v260, %v259
    %v271 = vpack.c.b16 %v262, %v261
    %v272 = vpack.c.b16 %v264, %v263
    %281 = vmatprep.subr.bf16.mxu0 0
    %282 = vmatpush1.bf16.msra.mxu0 %v265
    %283 = vmatprep.subr.bf16.mxu0 0
    %284 = vmatpush1.bf16.msra.mxu0 %v266
    %285 = vmatprep.subr.bf16.mxu0 0
    %286 = vmatpush1.bf16.msra.mxu0 %v267
    %287 = vmatprep.subr.bf16.mxu0 0
    %288 = vmatpush1.bf16.msra.mxu0 %v268
    %289 = vmatprep.subr.bf16.mxu0 0
    %290 = vmatpush1.bf16.msra.mxu0 %v269
    %291 = vmatprep.subr.bf16.mxu0 0
    %292 = vmatpush1.bf16.msra.mxu0 %v270
    %293 = vmatprep.subr.bf16.mxu0 0
    %294 = vmatpush1.bf16.msra.mxu0 %v271
    %295 = vmatprep.subr.bf16.mxu0 0
    %296 = vmatpush1.bf16.msra.mxu0 %v272
    %297 = vmatprep.subr.bf16.mxu0 0
    %298 = vmatpush1.bf16.msra.mxu0 0
    %299 = vmatprep.subr.bf16.mxu0 0
    %300 = vmatpush1.bf16.msra.mxu0 0
    %301 = vmatprep.subr.bf16.mxu0 0
    %302 = vmatpush1.bf16.msra.mxu0 0
    %303 = vmatprep.subr.bf16.mxu0 0
    %304 = vmatpush1.bf16.msra.mxu0 0
    %305 = vmatprep.subr.bf16.mxu0 0
    %306 = vmatpush1.bf16.msra.mxu0 0
    %307 = vmatprep.subr.bf16.mxu0 0
    %308 = vmatpush1.bf16.msra.mxu0 0
    %309 = vmatprep.subr.bf16.mxu0 0
    %310 = vmatpush1.bf16.msra.mxu0 0
    %311 = vmatprep.subr.bf16.mxu0 0
    %312 = vmatpush1.bf16.msra.mxu0 0
    %313 = vmatprep.mubr.bf16.mxu0 0
    %314 = vmatmul.mubr.bf16.gmra.mrb[0].mxu0 %v232
    %v315 = vpop.f32.mrb[0].mxu0
    %v316 = vadd.f32 0.0, %v315
    %v317 = vpop.f32.mrb[0].mxu0
    %v318 = vpop.f32.mrb[0].mxu0
    %v319 = vadd.f32 0.0, %v318
    %v320 = vpop.f32.mrb[0].mxu0
    %321 = vdwg.mxu0
    %322 = vst [vmem:[#allocation8] sm:$0xff] %v316
    %323 = vst [vmem:[#allocation8 + $0x8] sm:$0xff] %v319
    // Predicated region
    $region30: #{tpu_custom_call.1} parent=1 // pred_check
      _
    $region31: #{tpu_custom_call.1} parent=1 // pred_check_branch
      %325 = sbr.rel (0) target = $region33
    $region32: #{tpu_custom_call.1} parent=1 // pred_region
      %s327 = ssub.s32 256, 256
      %328 = vsyncadd [#allocation4], %s327
      %s329 = sshll.u32 [#allocation8], 4
      %s330 = int_to_ptr.vmem [resolvable:$true] %s329
      %335 = dma.vmem_to_hbm [thread:$0]  %s330, 256, %s4, [#allocation4], 128, 128, 8
    $region33: #{tpu_custom_call.1} parent=1 // pred_fallthru
      _
    // Predicated region
    $region34: #{tpu_custom_call.1} parent=1 // pred_check
      _
    $region35: #{tpu_custom_call.1} parent=1 // pred_check_branch
      %337 = sbr.rel (0) target = $region37
    $region36: #{tpu_custom_call.1} parent=1 // pred_region
      %338 = dma.done [#allocation4], 256
    $region37: #{tpu_custom_call.1} parent=1 // pred_fallthru
      _
    %339 = vsyncpa [#allocation3], 1
    %340 = vsyncpa [#allocation6], 1
    %341 = vsyncpa [#allocation4], 1

// kernel: tpu_custom_call.1
$region0: #{tpu_custom_call.1}
  #allocation0 [shape = 'u32[]', space=smem, size = 0x4, offset = 0x4, fixed_abs, tag = 'smem constant byte address 0x4 - core index']
  #allocation1 [shape = 'u32[144,128]{1,0:T(1,128)}', space=vmem, size = 0x12000, scoped, tag = 'internal scratch']
  %s0 = inlined_call_operand.hbm [shape: bf16[16,128], index: 0, kind: input, shape index: {}]
  %s1 = inlined_call_operand.hbm [shape: bf16[128,128], index: 1, kind: input, shape index: {}]
  %s2 = inlined_call_operand.vmem [shape: f32[2,128], index: 2, kind: input, shape index: {}]
  %s3 = inlined_call_operand.hbm [shape: bf16[128,128], index: 3, kind: input, shape index: {}]
  %s4 = inlined_call_operand.hbm [shape: f32[16,128], index: 4, kind: output, shape index: {}]
  %s5 = sld [smem:[#allocation0]]
  $region38: #{tpu_custom_call.1} parent=0
    _
  %s7 = ssub.s32 1, %s5
  %s8 = scalar_select 0, %s7, %s5
  $region1: #{tpu_custom_call.1} parent=0
    #allocation2 [shape = 'u8[4096]{0}', space=vmem, size = 0x1000, scoped, tag = 'input window, operand 0, single buffered']
    #allocation3 [shape = 's32[1]{0}', space=sflag, size = 0x4, scoped, tag = 'scoped memory for tpu_custom_call.1']
    #allocation4 [shape = 's32[1]{0}', space=sflag, size = 0x4, scoped, tag = 'scoped memory for tpu_custom_call.1']
    #allocation5 [shape = 'u8[32768]{0}', space=vmem, size = 0x8000, scoped, tag = 'input window, operand 1, single buffered']
    #allocation6 [shape = 's32[1]{0}', space=sflag, size = 0x4, scoped, tag = 'scoped memory for tpu_custom_call.1']
    #allocation7 [shape = 'u8[32768]{0}', space=vmem, size = 0x8000, scoped, tag = 'input window, operand 3, single buffered']
    #allocation8 [shape = 'u8[8192]{0}', space=vmem, size = 0x2000, scoped, tag = 'output window, operand 0, single buffered']
    %9 = vsyncpa [#allocation3], 0
    %10 = vsyncpa [#allocation6], 0
    %11 = vsyncpa [#allocation4], 0
    // Predicated region
    $region2: #{tpu_custom_call.1} parent=1 // pred_check
      _
    $region3: #{tpu_custom_call.1} parent=1 // pred_check_branch
      %13 = sbr.rel (0) target = $region5
    $region4: #{tpu_custom_call.1} parent=1 // pred_region
      %s15 = ssub.s32 128, 128
      %16 = vsyncadd [#allocation3], %s15
      %s17 = sshll.u32 [#allocation2], 4
      %s18 = int_to_ptr.vmem [resolvable:$true] %s17
      %23 = dma.hbm_to_vmem [thread:$0]  %s0, 128, %s18, [#allocation3], 64, 64, 4
    $region5: #{tpu_custom_call.1} parent=1 // pred_fallthru
      _
    // Predicated region
    $region6: #{tpu_custom_call.1} parent=1 // pred_check
      _
    $region7: #{tpu_custom_call.1} parent=1 // pred_check_branch
      %25 = sbr.rel (0) target = $region9
    $region8: #{tpu_custom_call.1} parent=1 // pred_region
      %s27 = ssub.s32 1024, 1024
      %28 = vsyncadd [#allocation6], %s27
      %s29 = sshll.u32 [#allocation5], 4
      %s30 = int_to_ptr.vmem [resolvable:$true] %s29
      %35 = dma.hbm_to_vmem [thread:$0]  %s1, 1024, %s30, [#allocation6], 64, 64, 4
    $region9: #{tpu_custom_call.1} parent=1 // pred_fallthru
      _
    // Predicated region
    $region10: #{tpu_custom_call.1} parent=1 // pred_check
      _
    $region11: #{tpu_custom_call.1} parent=1 // pred_check_branch
      %37 = sbr.rel (0) target = $region13
    $region12: #{tpu_custom_call.1} parent=1 // pred_region
      _
    $region13: #{tpu_custom_call.1} parent=1 // pred_fallthru
      _
    // Predicated region
    $region14: #{tpu_custom_call.1} parent=1 // pred_check
      _
    $region15: #{tpu_custom_call.1} parent=1 // pred_check_branch
      %39 = sbr.rel (0) target = $region17
    $region16: #{tpu_custom_call.1} parent=1 // pred_region
      %s41 = ssub.s32 1024, 1024
      %42 = vsyncadd [#allocation6], %s41
      %s43 = sshll.u32 [#allocation7], 4
      %s44 = int_to_ptr.vmem [resolvable:$true] %s43
      %49 = dma.hbm_to_vmem [thread:$0]  %s3, 1024, %s44, [#allocation6], 64, 64, 4
    $region17: #{tpu_custom_call.1} parent=1 // pred_fallthru
      _
    // Predicated region
    $region18: #{tpu_custom_call.1} parent=1 // pred_check
      _
    $region19: #{tpu_custom_call.1} parent=1 // pred_check_branch
      %51 = sbr.rel (0) target = $region21
    $region20: #{tpu_custom_call.1} parent=1 // pred_region
      %52 = dma.done [#allocation3], 128
    $region21: #{tpu_custom_call.1} parent=1 // pred_fallthru
      _
    // Predicated region
    $region22: #{tpu_custom_call.1} parent=1 // pred_check
      _
    $region23: #{tpu_custom_call.1} parent=1 // pred_check_branch
      %54 = sbr.rel (0) target = $region25
    $region24: #{tpu_custom_call.1} parent=1 // pred_region
      %55 = dma.done [#allocation6], 1024
    $region25: #{tpu_custom_call.1} parent=1 // pred_fallthru
      _
    // Predicated region
    $region26: #{tpu_custom_call.1} parent=1 // pred_check
      _
    $region27: #{tpu_custom_call.1} parent=1 // pred_check_branch
      %57 = sbr.rel (0) target = $region29
    $region28: #{tpu_custom_call.1} parent=1 // pred_region
      %58 = dma.done [#allocation6], 1024
    $region29: #{tpu_custom_call.1} parent=1 // pred_fallthru
      _
    %v60 = vld [vmem:[#allocation2] sm:$0xf]
    %v61 = vld [vmem:[#allocation2 + $0x4] sm:$0xf]
    %v62 = vld [vmem:[#allocation5] sm:$0xf]
    %v63 = vld [vmem:[#allocation5 + $0x4] sm:$0xf]
    %v64 = vld [vmem:[#allocation5 + $0x8] sm:$0xf]
    %v65 = vld [vmem:[#allocation5 + $0xc] sm:$0xf]
    %v66 = vld [vmem:[#allocation5 + $0x10] sm:$0xf]
    %v67 = vld [vmem:[#allocation5 + $0x14] sm:$0xf]
    %v68 = vld [vmem:[#allocation5 + $0x18] sm:$0xf]
    %v69 = vld [vmem:[#allocation5 + $0x1c] sm:$0xf]
    %v70 = vld [vmem:[#allocation5 + $0x20] sm:$0xf]
    %v71 = vld [vmem:[#allocation5 + $0x24] sm:$0xf]
    %v72 = vld [vmem:[#allocation5 + $0x28] sm:$0xf]
    %v73 = vld [vmem:[#allocation5 + $0x2c] sm:$0xf]
    %v74 = vld [vmem:[#allocation5 + $0x30] sm:$0xf]
    %v75 = vld [vmem:[#allocation5 + $0x34] sm:$0xf]
    %v76 = vld [vmem:[#allocation5 + $0x38] sm:$0xf]
    %v77 = vld [vmem:[#allocation5 + $0x3c] sm:$0xf]
    %v78 = vld [vmem:[#allocation7] sm:$0xf]
    %v79 = vld [vmem:[#allocation7 + $0x4] sm:$0xf]
    %v80 = vld [vmem:[#allocation7 + $0x8] sm:$0xf]
    %v81 = vld [vmem:[#allocation7 + $0xc] sm:$0xf]
    %v82 = vld [vmem:[#allocation7 + $0x10] sm:$0xf]
    %v83 = vld [vmem:[#allocation7 + $0x14] sm:$0xf]
    %v84 = vld [vmem:[#allocation7 + $0x18] sm:$0xf]
    %v85 = vld [vmem:[#allocation7 + $0x1c] sm:$0xf]
    %v86 = vld [vmem:[#allocation7 + $0x20] sm:$0xf]
    %v87 = vld [vmem:[#allocation7 + $0x24] sm:$0xf]
    %v88 = vld [vmem:[#allocation7 + $0x28] sm:$0xf]
    %v89 = vld [vmem:[#allocation7 + $0x2c] sm:$0xf]
    %v90 = vld [vmem:[#allocation7 + $0x30] sm:$0xf]
    %v91 = vld [vmem:[#allocation7 + $0x34] sm:$0xf]
    %v92 = vld [vmem:[#allocation7 + $0x38] sm:$0xf]
    %v93 = vld [vmem:[#allocation7 + $0x3c] sm:$0xf]
    %v94 = vld [vmem:[%s2] sm:$0x1]
    %v95 = vld [vmem:[%s2 + $0x1] sm:$0x1]
    %v98 = vunpack.c.l.b16 %v60
    %v99 = vunpack.c.l.b16 %v61
    %v100 = vpack.c.b16 %v99, %v98
    %v118 = vunpack.c.l.b16 %v62
    %v119 = vunpack.c.l.b16 %v63
    %v120 = vunpack.c.l.b16 %v64
    %v121 = vunpack.c.l.b16 %v65
    %v122 = vunpack.c.l.b16 %v66
    %v123 = vunpack.c.l.b16 %v67
    %v124 = vunpack.c.l.b16 %v68
    %v125 = vunpack.c.l.b16 %v69
    %v126 = vunpack.c.l.b16 %v70
    %v127 = vunpack.c.l.b16 %v71
    %v128 = vunpack.c.l.b16 %v72
    %v129 = vunpack.c.l.b16 %v73
    %v130 = vunpack.c.l.b16 %v74
    %v131 = vunpack.c.l.b16 %v75
    %v132 = vunpack.c.l.b16 %v76
    %v133 = vunpack.c.l.b16 %v77
    %v134 = vpack.c.b16 %v119, %v118
    %v135 = vpack.c.b16 %v121, %v120
    %v136 = vpack.c.b16 %v123, %v122
    %v137 = vpack.c.b16 %v125, %v124
    %v138 = vpack.c.b16 %v127, %v126
    %v139 = vpack.c.b16 %v129, %v128
    %v140 = vpack.c.b16 %v131, %v130
    %v141 = vpack.c.b16 %v133, %v132
    %150 = vmatprep.subr.bf16.mxu0 0
    %151 = vmatpush1.bf16.msra.mxu0 %v134
    %152 = vmatprep.subr.bf16.mxu0 0
    %153 = vmatpush1.bf16.msra.mxu0 %v135
    %154 = vmatprep.subr.bf16.mxu0 0
    %155 = vmatpush1.bf16.msra.mxu0 %v136
    %156 = vmatprep.subr.bf16.mxu0 0
    %157 = vmatpush1.bf16.msra.mxu0 %v137
    %158 = vmatprep.subr.bf16.mxu0 0
    %159 = vmatpush1.bf16.msra.mxu0 %v138
    %160 = vmatprep.subr.bf16.mxu0 0
    %161 = vmatpush1.bf16.msra.mxu0 %v139
    %162 = vmatprep.subr.bf16.mxu0 0
    %163 = vmatpush1.bf16.msra.mxu0 %v140
    %164 = vmatprep.subr.bf16.mxu0 0
    %165 = vmatpush1.bf16.msra.mxu0 %v141
    %166 = vmatprep.subr.bf16.mxu0 0
    %167 = vmatpush1.bf16.msra.mxu0 0
    %168 = vmatprep.subr.bf16.mxu0 0
    %169 = vmatpush1.bf16.msra.mxu0 0
    %170 = vmatprep.subr.bf16.mxu0 0
    %171 = vmatpush1.bf16.msra.mxu0 0
    %172 = vmatprep.subr.bf16.mxu0 0
    %173 = vmatpush1.bf16.msra.mxu0 0
    %174 = vmatprep.subr.bf16.mxu0 0
    %175 = vmatpush1.bf16.msra.mxu0 0
    %176 = vmatprep.subr.bf16.mxu0 0
    %177 = vmatpush1.bf16.msra.mxu0 0
    %178 = vmatprep.subr.bf16.mxu0 0
    %179 = vmatpush1.bf16.msra.mxu0 0
    %180 = vmatprep.subr.bf16.mxu0 0
    %181 = vmatpush1.bf16.msra.mxu0 0
    %182 = vmatprep.mubr.bf16.mxu0 0
    %183 = vmatmul.mubr.bf16.gmra.mrb[0].mxu0 %v100
    %v184 = vpop.f32.mrb[0].mxu0
    %v185 = vadd.f32 0.0, %v184
    %v186 = vpop.f32.mrb[0].mxu0
    %v187 = vpop.f32.mrb[0].mxu0
    %v188 = vadd.f32 0.0, %v187
    %v189 = vpop.f32.mrb[0].mxu0
    %190 = vdwg.mxu0
    %v191 = vmax.f32 %v185, 0.0
    %v192 = vmax.f32 %v188, 0.0
    %193 = vadd.xlane.f32.xlu0 %v191
    %v194 = vpop.xlane.xlu0 %193
    %195 = vadd.xlane.f32.xlu0 %v192
    %v196 = vpop.xlane.xlu0 %195
    %v197 = vmul.f32 %v194, 0.1
    %v198 = vmul.f32 %v196, 0.1
    %v199 = vlaneseq
    %v200 = vand.u32 %v199, 127
    %vm201 = vcmp.lt.s32.totalorder %v200, 10
    %v202 = vsub.f32 %v191, %v197
    %v203 = vsub.f32 %v192, %v198
    %v204 = vsel %vm201, %v202, 0.0
    %v205 = vsel %vm201, %v203, 0.0
    %v206 = vmul.f32 %v204, %v204
    %v207 = vmul.f32 %v205, %v205
    %208 = vadd.xlane.f32.xlu0 %v206
    %v209 = vpop.xlane.xlu0 %208
    %210 = vadd.xlane.f32.xlu0 %v207
    %v211 = vpop.xlane.xlu0 %210
    %v212 = vmul.f32 %v209, 0.1
    %v213 = vmul.f32 %v211, 0.1
    %v214 = vadd.f32 %v212, 1e-05
    %v215 = vadd.f32 %v213, 1e-05
    %v216 = vrsqrt.pop %v214
    %v217 = vrsqrt.pop %v215
    %v218 = vmul.f32 %v204, %v216
    %v219 = vmul.f32 %v205, %v217
    %v220 = vlaneseq
    %v221 = vshrl.u32 %v220, 7
    %v222 = vsub.s32 0, %v221
    %v223 = vrot.slane %v94, %v222
    %v224 = vmul.f32 %v218, %v223
    %v225 = vmul.f32 %v219, %v223
    %v226 = vlaneseq
    %v227 = vshrl.u32 %v226, 7
    %v228 = vsub.s32 0, %v227
    %v229 = vrot.slane %v95, %v228
    %v230 = vadd.f32 %v224, %v229
    %v231 = vadd.f32 %v225, %v229
    %v232 = vpack.c.bf16 %v231, %v230
    %v249 = vunpack.c.l.b16 %v78
    %v250 = vunpack.c.l.b16 %v79
    %v251 = vunpack.c.l.b16 %v80
    %v252 = vunpack.c.l.b16 %v81
    %v253 = vunpack.c.l.b16 %v82
    %v254 = vunpack.c.l.b16 %v83
    %v255 = vunpack.c.l.b16 %v84
    %v256 = vunpack.c.l.b16 %v85
    %v257 = vunpack.c.l.b16 %v86
    %v258 = vunpack.c.l.b16 %v87
    %v259 = vunpack.c.l.b16 %v88
    %v260 = vunpack.c.l.b16 %v89
    %v261 = vunpack.c.l.b16 %v90
    %v262 = vunpack.c.l.b16 %v91
    %v263 = vunpack.c.l.b16 %v92
    %v264 = vunpack.c.l.b16 %v93
    %v265 = vpack.c.b16 %v250, %v249
    %v266 = vpack.c.b16 %v252, %v251
    %v267 = vpack.c.b16 %v254, %v253
    %v268 = vpack.c.b16 %v256, %v255
    %v269 = vpack.c.b16 %v258, %v257
    %v270 = vpack.c.b16 %v260, %v259
    %v271 = vpack.c.b16 %v262, %v261
    %v272 = vpack.c.b16 %v264, %v263
    %281 = vmatprep.subr.bf16.mxu0 0
    %282 = vmatpush1.bf16.msra.mxu0 %v265
    %283 = vmatprep.subr.bf16.mxu0 0
    %284 = vmatpush1.bf16.msra.mxu0 %v266
    %285 = vmatprep.subr.bf16.mxu0 0
    %286 = vmatpush1.bf16.msra.mxu0 %v267
    %287 = vmatprep.subr.bf16.mxu0 0
    %288 = vmatpush1.bf16.msra.mxu0 %v268
    %289 = vmatprep.subr.bf16.mxu0 0
    %290 = vmatpush1.bf16.msra.mxu0 %v269
    %291 = vmatprep.subr.bf16.mxu0 0
    %292 = vmatpush1.bf16.msra.mxu0 %v270
    %293 = vmatprep.subr.bf16.mxu0 0
    %294 = vmatpush1.bf16.msra.mxu0 %v271
    %295 = vmatprep.subr.bf16.mxu0 0
    %296 = vmatpush1.bf16.msra.mxu0 %v272
    %297 = vmatprep.subr.bf16.mxu0 0
    %298 = vmatpush1.bf16.msra.mxu0 0
    %299 = vmatprep.subr.bf16.mxu0 0
    %300 = vmatpush1.bf16.msra.mxu0 0
    %301 = vmatprep.subr.bf16.mxu0 0
    %302 = vmatpush1.bf16.msra.mxu0 0
    %303 = vmatprep.subr.bf16.mxu0 0
    %304 = vmatpush1.bf16.msra.mxu0 0
    %305 = vmatprep.subr.bf16.mxu0 0
    %306 = vmatpush1.bf16.msra.mxu0 0
    %307 = vmatprep.subr.bf16.mxu0 0
    %308 = vmatpush1.bf16.msra.mxu0 0
    %309 = vmatprep.subr.bf16.mxu0 0
    %310 = vmatpush1.bf16.msra.mxu0 0
    %311 = vmatprep.subr.bf16.mxu0 0
    %312 = vmatpush1.bf16.msra.mxu0 0
    %313 = vmatprep.mubr.bf16.mxu0 0
    %314 = vmatmul.mubr.bf16.gmra.mrb[0].mxu0 %v232
    %v315 = vpop.f32.mrb[0].mxu0
    %v316 = vadd.f32 0.0, %v315
    %v317 = vpop.f32.mrb[0].mxu0
    %v318 = vpop.f32.mrb[0].mxu0
    %v319 = vadd.f32 0.0, %v318
    %v320 = vpop.f32.mrb[0].mxu0
    %321 = vdwg.mxu0
    %322 = vst [vmem:[#allocation8] sm:$0xff] %v316
    %323 = vst [vmem:[#allocation8 + $0x8] sm:$0xff] %v319
    // Predicated region
    $region30: #{tpu_custom_call.1} parent=1 // pred_check
      _
    $region31: #{tpu_custom_call.1} parent=1 // pred_check_branch
      %325 = sbr.rel (0) target = $region33
    $region32: #{tpu_custom_call.1} parent=1 // pred_region
      %s327 = ssub.s32 256, 256
      %328 = vsyncadd [#allocation4], %s327
      %s329 = sshll.u32 [#allocation8], 4
      %s330 = int_to_ptr.vmem [resolvable:$true] %s329
      %335 = dma.vmem_to_hbm [thread:$0]  %s330, 256, %s4, [#allocation4], 128, 128, 8
    $region33: #{tpu_custom_call.1} parent=1 // pred_fallthru
      _
    // Predicated region
    $region34: #{tpu_custom_call.1} parent=1 // pred_check
      _
    $region35: #{tpu_custom_call.1} parent=1 // pred_check_branch
      %337 = sbr.rel (0) target = $region37
    $region36: #{tpu_custom_call.1} parent=1 // pred_region
      %338 = dma.done [#allocation4], 256
    $region37: #{tpu_custom_call.1} parent=1 // pred_fallthru
      _
    %339 = vsyncpa [#allocation3], 1
    %340 = vsyncpa [#allocation6], 1
    %341 = vsyncpa [#allocation4], 1

</llo_original>
